<compile_context>
chip_gen: v6e
topology: v6e:2x2x1
jax: 0.10.0
libtpu: 0.0.40
codegen_flags: <defaults>
</compile_context>

<pallas_src>
import jax
import jax.numpy as jnp
from jax.experimental import pallas as pl
from jax.experimental.pallas import tpu as pltpu


def _round_up(x, m):
    return ((x + m - 1) // m) * m


def _fc_kernel(x_ref, t_ref, w1x_ref, w1t_ref, b1_ref,
               w2_ref, b2_ref, w3_ref, b3_ref, o_ref):
    # Layer 1: Linear(D+1 -> H) + ReLU, with the "t column" folded into a
    # rank-1 VPU term instead of a K=D+1 MXU contraction.
    h = jnp.dot(x_ref[...], w1x_ref[...], preferred_element_type=jnp.float32)
    h = jnp.maximum(h + t_ref[...] * w1t_ref[...] + b1_ref[...], 0.0)
    # Layer 2: Linear(H -> H) + ReLU
    h = jnp.dot(h.astype(jnp.bfloat16), w2_ref[...],
                preferred_element_type=jnp.float32)
    h = jnp.maximum(h + b2_ref[...], 0.0)
    # Layer 3: Linear(H -> D), no activation
    h = jnp.dot(h.astype(jnp.bfloat16), w3_ref[...],
                preferred_element_type=jnp.float32)
    o_ref[...] = (h + b3_ref[...]).astype(o_ref.dtype)


def fc_network_forward(x, t, params, *, tile_b=256):
    """x: [B, D] f32, t: [B, 1] f32. Returns [B, D] f32."""
    w1, b1, w2, b2, w3, b3 = params        # w*: [in, out] f32, b*: [1, out] f32
    B, D = x.shape
    H = w2.shape[0]

    # Lane-dense padded dims and batch tile (multiple of 8 sublanes).
    Dp = _round_up(D, 128)
    Hp = _round_up(H, 128)
    TB = _round_up(min(tile_b, _round_up(B, 8)), 8)
    Bp = _round_up(B, TB)

    # Split W1 into x-part and t-part (removes the concat + K=D+1 contraction).
    w1x = w1[:D]          # [D, H]
    w1t = w1[D:D + 1]     # [1, H]

    def pad2(a, r, c, dtype):
        return jnp.zeros((r, c), dtype).at[:a.shape[0], :a.shape[1]].set(
            a.astype(dtype))

    # Zero-pad (so padded lanes contribute exactly 0) and cast MXU weights to bf16.
    w1x_p = pad2(w1x, Dp, Hp, jnp.bfloat16)
    w2_p = pad2(w2, Hp, Hp, jnp.bfloat16)
    w3_p = pad2(w3, Hp, Dp, jnp.bfloat16)
    w1t_p = pad2(w1t, 1, Hp, jnp.float32)
    b1_p = pad2(b1, 1, Hp, jnp.float32)
    b2_p = pad2(b2, 1, Hp, jnp.float32)
    b3_p = pad2(b3, 1, Dp, jnp.float32)

    x_p = jnp.zeros((Bp, Dp), jnp.bfloat16).at[:B, :D].set(
        x.astype(jnp.bfloat16))
    t_p = jnp.zeros((Bp, 1), jnp.float32).at[:B, :].set(
        t.astype(jnp.float32))

    grid = (Bp // TB,)

    def batch_spec(shape):
        return pl.BlockSpec(shape, lambda i: (i, 0))

    def const_spec(shape):
        return pl.BlockSpec(shape, lambda i: (0, 0))

    weight_bytes = ((w1x_p.size + w2_p.size + w3_p.size) * 2
                    + (w1t_p.size + b1_p.size + b2_p.size + b3_p.size) * 4)
    io_tile_bytes = TB * Dp * 2 + TB * 128 * 4 + TB * Dp * 4
    act_bytes = 4 * TB * Hp * 4
    vmem_est = 2 * weight_bytes + 2 * io_tile_bytes + act_bytes + (4 << 20)
    vmem_limit = int(min(max(vmem_est, 16 << 20), 64 << 20))   # v7x-safe clamp

    flops = 2 * Bp * (Dp * Hp + Hp * Hp + Hp * Dp)
    bytes_accessed = (x_p.size * 2 + t_p.size * 4 + Bp * Dp * 4 + weight_bytes)

    out_p = pl.pallas_call(
        _fc_kernel,
        out_shape=jax.ShapeDtypeStruct((Bp, Dp), jnp.float32),
        grid=grid,
        in_specs=[
            batch_spec((TB, Dp)),   # x  (pipelined per batch tile)
            batch_spec((TB, 1)),    # t
            const_spec((Dp, Hp)),   # W1x (resident)
            const_spec((1, Hp)),    # w1t
            const_spec((1, Hp)),    # b1
            const_spec((Hp, Hp)),   # W2
            const_spec((1, Hp)),    # b2
            const_spec((Hp, Dp)),   # W3
            const_spec((1, Dp)),    # b3
        ],
        out_specs=batch_spec((TB, Dp)),
        compiler_params=pltpu.CompilerParams(
            dimension_semantics=("parallel",),
            vmem_limit_bytes=vmem_limit),
        cost_estimate=pl.CostEstimate(
            flops=flops, transcendentals=0, bytes_accessed=bytes_accessed),
    )(x_p, t_p, w1x_p, w1t_p, b1_p, w2_p, b2_p, w3_p, b3_p)

    return out_p[:B, :D]


def init_params(key, input_dim, num_hidden):
    """Deterministic synthetic parameters (weights stored as [in, out])."""
    ks = jax.random.split(key, 6)

    def lin(kw, kb, fan_in, fan_out):
        bound = 1.0 / jnp.sqrt(fan_in)
        w = jax.random.uniform(kw, (fan_in, fan_out), jnp.float32, -bound, bound)
        b = jax.random.uniform(kb, (1, fan_out), jnp.float32, -bound, bound)
        return w, b

    w1, b1 = lin(ks[0], ks[1], input_dim + 1, num_hidden)
    w2, b2 = lin(ks[2], ks[3], num_hidden, num_hidden)
    w3, b3 = lin(ks[4], ks[5], num_hidden, input_dim)
    return (w1, b1, w2, b2, w3, b3)


def fc_network_ref(x, t, params):
    """Plain-JAX f32 reference (PyTorch semantics)."""
    w1, b1, w2, b2, w3, b3 = params
    h = jnp.concatenate([x, t], axis=1)
    h = jnp.maximum(h @ w1 + b1, 0.0)
    h = jnp.maximum(h @ w2 + b2, 0.0)
    return h @ w3 + b3


def fc_network_ref_lowp(x, t, params):
    """Reference matching the kernel's bf16-operand / f32-accumulate dots."""
    w1, b1, w2, b2, w3, b3 = params
    D = x.shape[1]
    w1x = w1[:D].astype(jnp.bfloat16)
    w1t = w1[D:D + 1]
    h = jnp.dot(x.astype(jnp.bfloat16), w1x, preferred_element_type=jnp.float32)
    h = jnp.maximum(h + t * w1t + b1, 0.0)
    h = jnp.dot(h.astype(jnp.bfloat16), w2.astype(jnp.bfloat16),
                preferred_element_type=jnp.float32)
    h = jnp.maximum(h + b2, 0.0)
    h = jnp.dot(h.astype(jnp.bfloat16), w3.astype(jnp.bfloat16),
                preferred_element_type=jnp.float32)
    return h + b3


if __name__ == "__main__":
    key = jax.random.PRNGKey(0)
    k_x, k_t, k_p = jax.random.split(key, 3)

    B, INPUT_DIM, NUM_HIDDEN = 8, 32, 64
    x = jax.random.normal(k_x, (B, INPUT_DIM), jnp.float32)
    t = jax.random.uniform(k_t, (B, 1), jnp.float32)
    params = init_params(k_p, INPUT_DIM, NUM_HIDDEN)

    out = jax.block_until_ready(fc_network_forward(x, t, params))
    ref_lp = fc_network_ref_lowp(x, t, params)
    ref_f32 = fc_network_ref(x, t, params)

    assert out.shape == (B, INPUT_DIM), out.shape
    assert jnp.allclose(out, ref_lp, atol=2e-3, rtol=2e-3), \
        "mismatch vs bf16-matched reference"
    assert jnp.allclose(out, ref_f32, atol=5e-2, rtol=5e-2), \
        "mismatch vs f32 reference"
    print("KERNEL_OK")
</pallas_src>

<mosaic_0001>
module attributes {stable_mosaic.version = 11 : i64} {
  func.func @_fc_kernel(%arg0: i32, %arg1: memref<8x128xbf16, #tpu.memory_space<vmem>>, %arg2: memref<8x1xf32, #tpu.memory_space<vmem>>, %arg3: memref<128x128xbf16, #tpu.memory_space<vmem>>, %arg4: memref<1x128xf32, #tpu.memory_space<vmem>>, %arg5: memref<1x128xf32, #tpu.memory_space<vmem>>, %arg6: memref<128x128xbf16, #tpu.memory_space<vmem>>, %arg7: memref<1x128xf32, #tpu.memory_space<vmem>>, %arg8: memref<128x128xbf16, #tpu.memory_space<vmem>>, %arg9: memref<1x128xf32, #tpu.memory_space<vmem>>, %arg10: memref<8x128xf32, #tpu.memory_space<vmem>>) attributes {dimension_semantics = [#tpu.dimension_semantics<parallel>], iteration_bounds = array<i64: 1>, scalar_prefetch = 0 : i64, scratch_operands = 0 : i64, tpu.core_type = #tpu.core_type<tc>, window_params = [{transform_indices = @transform_0, window_bounds = array<i64: 8, 128>}, {transform_indices = @transform_1, window_bounds = array<i64: 8, 1>}, {pipeline_mode = #tpu.pipeline_mode<synchronous>, transform_indices = @transform_2, window_bounds = array<i64: 128, 128>}, {pipeline_mode = #tpu.pipeline_mode<synchronous>, transform_indices = @transform_3, window_bounds = array<i64: 1, 128>}, {pipeline_mode = #tpu.pipeline_mode<synchronous>, transform_indices = @transform_4, window_bounds = array<i64: 1, 128>}, {pipeline_mode = #tpu.pipeline_mode<synchronous>, transform_indices = @transform_5, window_bounds = array<i64: 128, 128>}, {pipeline_mode = #tpu.pipeline_mode<synchronous>, transform_indices = @transform_6, window_bounds = array<i64: 1, 128>}, {pipeline_mode = #tpu.pipeline_mode<synchronous>, transform_indices = @transform_7, window_bounds = array<i64: 128, 128>}, {pipeline_mode = #tpu.pipeline_mode<synchronous>, transform_indices = @transform_8, window_bounds = array<i64: 1, 128>}, {transform_indices = @transform_9, window_bounds = array<i64: 8, 128>}]} {
    %c0 = arith.constant 0 : index
    %c0_0 = arith.constant 0 : index
    %0 = vector.load %arg1[%c0, %c0_0] : memref<8x128xbf16, #tpu.memory_space<vmem>>, vector<8x128xbf16>
    %c0_1 = arith.constant 0 : index
    %c0_2 = arith.constant 0 : index
    %1 = vector.load %arg3[%c0_1, %c0_2] : memref<128x128xbf16, #tpu.memory_space<vmem>>, vector<128x128xbf16>
    %cst = arith.constant dense<0.000000e+00> : vector<8x128xf32>
    %2 = tpu.matmul %0, %1, %cst {dimension_numbers = #tpu.dot_dimension_numbers<[1], [0], [0], [1], [0, 0, 1, 1], [], []>} : vector<8x128xbf16>, vector<128x128xbf16>, vector<8x128xf32> -> vector<8x128xf32>
    %c0_3 = arith.constant 0 : index
    %c0_4 = arith.constant 0 : index
    %3 = vector.load %arg2[%c0_3, %c0_4] : memref<8x1xf32, #tpu.memory_space<vmem>>, vector<8x1xf32>
    %c0_5 = arith.constant 0 : index
    %c0_6 = arith.constant 0 : index
    %4 = vector.load %arg4[%c0_5, %c0_6] : memref<1x128xf32, #tpu.memory_space<vmem>>, vector<1x128xf32>
    %5 = vector.broadcast %3 : vector<8x1xf32> to vector<8x128xf32>
    %6 = vector.broadcast %4 : vector<1x128xf32> to vector<8x128xf32>
    %7 = arith.mulf %5, %6 : vector<8x128xf32>
    %8 = arith.addf %2, %7 : vector<8x128xf32>
    %c0_7 = arith.constant 0 : index
    %c0_8 = arith.constant 0 : index
    %9 = vector.load %arg5[%c0_7, %c0_8] : memref<1x128xf32, #tpu.memory_space<vmem>>, vector<1x128xf32>
    %10 = vector.broadcast %9 : vector<1x128xf32> to vector<8x128xf32>
    %11 = arith.addf %8, %10 : vector<8x128xf32>
    %cst_9 = arith.constant 0.000000e+00 : f32
    %12 = vector.broadcast %cst_9 : f32 to vector<8x128xf32>
    %13 = arith.maximumf %11, %12 : vector<8x128xf32>
    %14 = arith.truncf %13 : vector<8x128xf32> to vector<8x128xbf16>
    %c0_10 = arith.constant 0 : index
    %c0_11 = arith.constant 0 : index
    %15 = vector.load %arg6[%c0_10, %c0_11] : memref<128x128xbf16, #tpu.memory_space<vmem>>, vector<128x128xbf16>
    %cst_12 = arith.constant dense<0.000000e+00> : vector<8x128xf32>
    %16 = tpu.matmul %14, %15, %cst_12 {dimension_numbers = #tpu.dot_dimension_numbers<[1], [0], [0], [1], [0, 0, 1, 1], [], []>} : vector<8x128xbf16>, vector<128x128xbf16>, vector<8x128xf32> -> vector<8x128xf32>
    %c0_13 = arith.constant 0 : index
    %c0_14 = arith.constant 0 : index
    %17 = vector.load %arg7[%c0_13, %c0_14] : memref<1x128xf32, #tpu.memory_space<vmem>>, vector<1x128xf32>
    %18 = vector.broadcast %17 : vector<1x128xf32> to vector<8x128xf32>
    %19 = arith.addf %16, %18 : vector<8x128xf32>
    %cst_15 = arith.constant 0.000000e+00 : f32
    %20 = vector.broadcast %cst_15 : f32 to vector<8x128xf32>
    %21 = arith.maximumf %19, %20 : vector<8x128xf32>
    %22 = arith.truncf %21 : vector<8x128xf32> to vector<8x128xbf16>
    %c0_16 = arith.constant 0 : index
    %c0_17 = arith.constant 0 : index
    %23 = vector.load %arg8[%c0_16, %c0_17] : memref<128x128xbf16, #tpu.memory_space<vmem>>, vector<128x128xbf16>
    %cst_18 = arith.constant dense<0.000000e+00> : vector<8x128xf32>
    %24 = tpu.matmul %22, %23, %cst_18 {dimension_numbers = #tpu.dot_dimension_numbers<[1], [0], [0], [1], [0, 0, 1, 1], [], []>} : vector<8x128xbf16>, vector<128x128xbf16>, vector<8x128xf32> -> vector<8x128xf32>
    %c0_19 = arith.constant 0 : index
    %c0_20 = arith.constant 0 : index
    %25 = vector.load %arg9[%c0_19, %c0_20] : memref<1x128xf32, #tpu.memory_space<vmem>>, vector<1x128xf32>
    %26 = vector.broadcast %25 : vector<1x128xf32> to vector<8x128xf32>
    %27 = arith.addf %24, %26 : vector<8x128xf32>
    %c0_21 = arith.constant 0 : index
    %c0_22 = arith.constant 0 : index
    %28 = vector.load %arg10[%c0_21, %c0_22] : memref<8x128xf32, #tpu.memory_space<vmem>>, vector<8x128xf32>
    tpu.vector_store %arg10[%c0_21, %c0_22], %27 {strides = array<i32>} : memref<8x128xf32, #tpu.memory_space<vmem>>, vector<8x128xf32>,
    return
  }
  func.func @transform_0(%arg0: i32) -> (i32, i32) {
    %c0_i32 = arith.constant 0 : i32
    %c0_i32_0 = arith.constant 0 : i32
    return %arg0, %c0_i32 : i32, i32
  }
  func.func @transform_1(%arg0: i32) -> (i32, i32) {
    %c0_i32 = arith.constant 0 : i32
    %c0_i32_0 = arith.constant 0 : i32
    return %arg0, %c0_i32 : i32, i32
  }
  func.func @transform_2(%arg0: i32) -> (i32, i32) {
    %c0_i32 = arith.constant 0 : i32
    %c0_i32_0 = arith.constant 0 : i32
    %c0_i32_1 = arith.constant 0 : i32
    return %c0_i32, %c0_i32_0 : i32, i32
  }
  func.func @transform_3(%arg0: i32) -> (i32, i32) {
    %c0_i32 = arith.constant 0 : i32
    %c0_i32_0 = arith.constant 0 : i32
    %c0_i32_1 = arith.constant 0 : i32
    return %c0_i32, %c0_i32_0 : i32, i32
  }
  func.func @transform_4(%arg0: i32) -> (i32, i32) {
    %c0_i32 = arith.constant 0 : i32
    %c0_i32_0 = arith.constant 0 : i32
    %c0_i32_1 = arith.constant 0 : i32
    return %c0_i32, %c0_i32_0 : i32, i32
  }
  func.func @transform_5(%arg0: i32) -> (i32, i32) {
    %c0_i32 = arith.constant 0 : i32
    %c0_i32_0 = arith.constant 0 : i32
    %c0_i32_1 = arith.constant 0 : i32
    return %c0_i32, %c0_i32_0 : i32, i32
  }
  func.func @transform_6(%arg0: i32) -> (i32, i32) {
    %c0_i32 = arith.constant 0 : i32
    %c0_i32_0 = arith.constant 0 : i32
    %c0_i32_1 = arith.constant 0 : i32
    return %c0_i32, %c0_i32_0 : i32, i32
  }
  func.func @transform_7(%arg0: i32) -> (i32, i32) {
    %c0_i32 = arith.constant 0 : i32
    %c0_i32_0 = arith.constant 0 : i32
    %c0_i32_1 = arith.constant 0 : i32
    return %c0_i32, %c0_i32_0 : i32, i32
  }
  func.func @transform_8(%arg0: i32) -> (i32, i32) {
    %c0_i32 = arith.constant 0 : i32
    %c0_i32_0 = arith.constant 0 : i32
    %c0_i32_1 = arith.constant 0 : i32
    return %c0_i32, %c0_i32_0 : i32, i32
  }
  func.func @transform_9(%arg0: i32) -> (i32, i32) {
    %c0_i32 = arith.constant 0 : i32
    %c0_i32_0 = arith.constant 0 : i32
    return %arg0, %c0_i32 : i32, i32
  }
}

</mosaic_0001>

<llo_original>
// kernel: tpu_custom_call.1
$region0: #{tpu_custom_call.1}
  #allocation0 [shape = 'u32[]', space=smem, size = 0x4, offset = 0x4, fixed_abs, tag = 'smem constant byte address 0x4 - core index']
  #allocation1 [shape = 'u32[144,128]{1,0:T(1,128)}', space=vmem, size = 0x12000, scoped, tag = 'internal scratch']
  %s0 = inlined_call_operand.vmem [shape: bf16[8,128], index: 0, kind: input, shape index: {}]
  %s1 = inlined_call_operand.vmem [shape: f32[8,1], index: 1, kind: input, shape index: {}]
  %s2 = inlined_call_operand.hbm [shape: bf16[128,128], index: 2, kind: input, shape index: {}]
  %s3 = inlined_call_operand.vmem [shape: f32[1,128], index: 3, kind: input, shape index: {}]
  %s4 = inlined_call_operand.vmem [shape: f32[1,128], index: 4, kind: input, shape index: {}]
  %s5 = inlined_call_operand.hbm [shape: bf16[128,128], index: 5, kind: input, shape index: {}]
  %s6 = inlined_call_operand.vmem [shape: f32[1,128], index: 6, kind: input, shape index: {}]
  %s7 = inlined_call_operand.hbm [shape: bf16[128,128], index: 7, kind: input, shape index: {}]
  %s8 = inlined_call_operand.vmem [shape: f32[1,128], index: 8, kind: input, shape index: {}]
  %s9 = inlined_call_operand.hbm [shape: f32[8,128], index: 9, kind: output, shape index: {}]
  %s10 = sld [smem:[#allocation0]]
  $region58: #{tpu_custom_call.1} parent=0
    _
  %s12 = ssub.s32 1, %s10
  %s13 = scalar_select 0, %s12, %s10
  $region1: #{tpu_custom_call.1} parent=0
    #allocation2 [shape = 'u8[32768]{0}', space=vmem, size = 0x8000, scoped, tag = 'input window, operand 2, single buffered']
    #allocation3 [shape = 's32[1]{0}', space=sflag, size = 0x4, scoped, tag = 'scoped memory for tpu_custom_call.1']
    #allocation4 [shape = 's32[1]{0}', space=sflag, size = 0x4, scoped, tag = 'scoped memory for tpu_custom_call.1']
    #allocation5 [shape = 'u8[32768]{0}', space=vmem, size = 0x8000, scoped, tag = 'input window, operand 5, single buffered']
    #allocation6 [shape = 's32[1]{0}', space=sflag, size = 0x4, scoped, tag = 'scoped memory for tpu_custom_call.1']
    #allocation7 [shape = 'u8[32768]{0}', space=vmem, size = 0x8000, scoped, tag = 'input window, operand 7, single buffered']
    #allocation8 [shape = 'u8[4096]{0}', space=vmem, size = 0x1000, scoped, tag = 'output window, operand 0, single buffered']
    %14 = vsyncpa [#allocation3], 0
    %15 = vsyncpa [#allocation6], 0
    %16 = vsyncpa [#allocation4], 0
    // Predicated region
    $region2: #{tpu_custom_call.1} parent=1 // pred_check
      _
    $region3: #{tpu_custom_call.1} parent=1 // pred_check_branch
      %18 = sbr.rel (0) target = $region5
    $region4: #{tpu_custom_call.1} parent=1 // pred_region
      _
    $region5: #{tpu_custom_call.1} parent=1 // pred_fallthru
      _
    // Predicated region
    $region6: #{tpu_custom_call.1} parent=1 // pred_check
      _
    $region7: #{tpu_custom_call.1} parent=1 // pred_check_branch
      %20 = sbr.rel (0) target = $region9
    $region8: #{tpu_custom_call.1} parent=1 // pred_region
      _
    $region9: #{tpu_custom_call.1} parent=1 // pred_fallthru
      _
    // Predicated region
    $region10: #{tpu_custom_call.1} parent=1 // pred_check
      _
    $region11: #{tpu_custom_call.1} parent=1 // pred_check_branch
      %22 = sbr.rel (0) target = $region13
    $region12: #{tpu_custom_call.1} parent=1 // pred_region
      %s24 = ssub.s32 1024, 1024
      %25 = vsyncadd [#allocation3], %s24
      %s26 = sshll.u32 [#allocation2], 4
      %s27 = int_to_ptr.vmem [resolvable:$true] %s26
      %32 = dma.hbm_to_vmem [thread:$0]  %s2, 1024, %s27, [#allocation3], 64, 64, 4
    $region13: #{tpu_custom_call.1} parent=1 // pred_fallthru
      _
    // Predicated region
    $region14: #{tpu_custom_call.1} parent=1 // pred_check
      _
    $region15: #{tpu_custom_call.1} parent=1 // pred_check_branch
      %34 = sbr.rel (0) target = $region17
    $region16: #{tpu_custom_call.1} parent=1 // pred_region
      _
    $region17: #{tpu_custom_call.1} parent=1 // pred_fallthru
      _
    // Predicated region
    $region18: #{tpu_custom_call.1} parent=1 // pred_check
      _
    $region19: #{tpu_custom_call.1} parent=1 // pred_check_branch
      %36 = sbr.rel (0) target = $region21
    $region20: #{tpu_custom_call.1} parent=1 // pred_region
      _
    $region21: #{tpu_custom_call.1} parent=1 // pred_fallthru
      _
    // Predicated region
    $region22: #{tpu_custom_call.1} parent=1 // pred_check
      _
    $region23: #{tpu_custom_call.1} parent=1 // pred_check_branch
      %38 = sbr.rel (0) target = $region25
    $region24: #{tpu_custom_call.1} parent=1 // pred_region
      %s40 = ssub.s32 1024, 1024
      %41 = vsyncadd [#allocation6], %s40
      %s42 = sshll.u32 [#allocation5], 4
      %s43 = int_to_ptr.vmem [resolvable:$true] %s42
      %48 = dma.hbm_to_vmem [thread:$0]  %s5, 1024, %s43, [#allocation6], 64, 64, 4
    $region25: #{tpu_custom_call.1} parent=1 // pred_fallthru
      _
    // Predicated region
    $region26: #{tpu_custom_call.1} parent=1 // pred_check
      _
    $region27: #{tpu_custom_call.1} parent=1 // pred_check_branch
      %50 = sbr.rel (0) target = $region29
    $region28: #{tpu_custom_call.1} parent=1 // pred_region
      _
    $region29: #{tpu_custom_call.1} parent=1 // pred_fallthru
      _
    // Predicated region
    $region30: #{tpu_custom_call.1} parent=1 // pred_check
      _
    $region31: #{tpu_custom_call.1} parent=1 // pred_check_branch
      %52 = sbr.rel (0) target = $region33
    $region32: #{tpu_custom_call.1} parent=1 // pred_region
      %s54 = ssub.s32 1024, 1024
      %55 = vsyncadd [#allocation6], %s54
      %s56 = sshll.u32 [#allocation7], 4
      %s57 = int_to_ptr.vmem [resolvable:$true] %s56
      %62 = dma.hbm_to_vmem [thread:$0]  %s7, 1024, %s57, [#allocation6], 64, 64, 4
    $region33: #{tpu_custom_call.1} parent=1 // pred_fallthru
      _
    // Predicated region
    $region34: #{tpu_custom_call.1} parent=1 // pred_check
      _
    $region35: #{tpu_custom_call.1} parent=1 // pred_check_branch
      %64 = sbr.rel (0) target = $region37
    $region36: #{tpu_custom_call.1} parent=1 // pred_region
      _
    $region37: #{tpu_custom_call.1} parent=1 // pred_fallthru
      _
    // Predicated region
    $region38: #{tpu_custom_call.1} parent=1 // pred_check
      _
    $region39: #{tpu_custom_call.1} parent=1 // pred_check_branch
      %66 = sbr.rel (0) target = $region41
    $region40: #{tpu_custom_call.1} parent=1 // pred_region
      %67 = dma.done [#allocation3], 1024
    $region41: #{tpu_custom_call.1} parent=1 // pred_fallthru
      _
    // Predicated region
    $region42: #{tpu_custom_call.1} parent=1 // pred_check
      _
    $region43: #{tpu_custom_call.1} parent=1 // pred_check_branch
      %69 = sbr.rel (0) target = $region45
    $region44: #{tpu_custom_call.1} parent=1 // pred_region
      %70 = dma.done [#allocation6], 1024
    $region45: #{tpu_custom_call.1} parent=1 // pred_fallthru
      _
    // Predicated region
    $region46: #{tpu_custom_call.1} parent=1 // pred_check
      _
    $region47: #{tpu_custom_call.1} parent=1 // pred_check_branch
      %72 = sbr.rel (0) target = $region49
    $region48: #{tpu_custom_call.1} parent=1 // pred_region
      %73 = dma.done [#allocation6], 1024
    $region49: #{tpu_custom_call.1} parent=1 // pred_fallthru
      _
    %v75 = vld [vmem:[%s0] sm:$0xf]
    %v76 = vld [vmem:[#allocation2] sm:$0xf]
    %v77 = vld [vmem:[#allocation2 + $0x4] sm:$0xf]
    %v78 = vld [vmem:[#allocation2 + $0x8] sm:$0xf]
    %v79 = vld [vmem:[#allocation2 + $0xc] sm:$0xf]
    %v80 = vld [vmem:[#allocation2 + $0x10] sm:$0xf]
    %v81 = vld [vmem:[#allocation2 + $0x14] sm:$0xf]
    %v82 = vld [vmem:[#allocation2 + $0x18] sm:$0xf]
    %v83 = vld [vmem:[#allocation2 + $0x1c] sm:$0xf]
    %v84 = vld [vmem:[#allocation2 + $0x20] sm:$0xf]
    %v85 = vld [vmem:[#allocation2 + $0x24] sm:$0xf]
    %v86 = vld [vmem:[#allocation2 + $0x28] sm:$0xf]
    %v87 = vld [vmem:[#allocation2 + $0x2c] sm:$0xf]
    %v88 = vld [vmem:[#allocation2 + $0x30] sm:$0xf]
    %v89 = vld [vmem:[#allocation2 + $0x34] sm:$0xf]
    %v90 = vld [vmem:[#allocation2 + $0x38] sm:$0xf]
    %v91 = vld [vmem:[#allocation2 + $0x3c] sm:$0xf]
    %v92 = vld [vmem:[%s1] sm:$0xff]
    %v93 = vld [vmem:[%s3] sm:$0x1]
    %95 = vset.pattern.permute.xlu0 0
    %96 = vperm.xlu0 %95, %v92
    %v97 = vpop.permute.xlu0 %96
    %v100 = vlaneseq
    %v101 = vshrl.u32 %v100, 7
    %v102 = vsub.s32 0, %v101
    %v103 = vrot.slane %v93, %v102
    %v105 = vmul.f32 %v97, %v103
    %v122 = vunpack.c.l.b16 %v76
    %v123 = vunpack.c.l.b16 %v77
    %v124 = vunpack.c.l.b16 %v78
    %v125 = vunpack.c.l.b16 %v79
    %v126 = vunpack.c.l.b16 %v80
    %v127 = vunpack.c.l.b16 %v81
    %v128 = vunpack.c.l.b16 %v82
    %v129 = vunpack.c.l.b16 %v83
    %v130 = vunpack.c.l.b16 %v84
    %v131 = vunpack.c.l.b16 %v85
    %v132 = vunpack.c.l.b16 %v86
    %v133 = vunpack.c.l.b16 %v87
    %v134 = vunpack.c.l.b16 %v88
    %v135 = vunpack.c.l.b16 %v89
    %v136 = vunpack.c.l.b16 %v90
    %v137 = vunpack.c.l.b16 %v91
    %v138 = vpack.c.b16 %v123, %v122
    %v139 = vpack.c.b16 %v125, %v124
    %v140 = vpack.c.b16 %v127, %v126
    %v141 = vpack.c.b16 %v129, %v128
    %v142 = vpack.c.b16 %v131, %v130
    %v143 = vpack.c.b16 %v133, %v132
    %v144 = vpack.c.b16 %v135, %v134
    %v145 = vpack.c.b16 %v137, %v136
    %154 = vmatprep.subr.bf16.mxu0 0
    %155 = vmatpush1.bf16.msra.mxu0 %v145
    %156 = vmatprep.subr.bf16.mxu0 0
    %157 = vmatpush1.bf16.msra.mxu0 %v144
    %158 = vmatprep.subr.bf16.mxu0 0
    %159 = vmatpush1.bf16.msra.mxu0 %v143
    %160 = vmatprep.subr.bf16.mxu0 0
    %161 = vmatpush1.bf16.msra.mxu0 %v142
    %162 = vmatprep.subr.bf16.mxu0 0
    %163 = vmatpush1.bf16.msra.mxu0 %v141
    %164 = vmatprep.subr.bf16.mxu0 0
    %165 = vmatpush1.bf16.msra.mxu0 %v140
    %166 = vmatprep.subr.bf16.mxu0 0
    %167 = vmatpush1.bf16.msra.mxu0 %v139
    %168 = vmatprep.subr.bf16.mxu0 0
    %169 = vmatpush1.bf16.msra.mxu0 %v138
    %170 = vmatprep.subr.bf16.mxu0 0
    %171 = vmatpush2.bf16.msra.mxu0 0
    %172 = vmatprep.subr.bf16.mxu0 0
    %173 = vmatpush2.bf16.msra.mxu0 0
    %174 = vmatprep.subr.bf16.mxu0 0
    %175 = vmatpush2.bf16.msra.mxu0 0
    %176 = vmatprep.subr.bf16.mxu0 0
    %177 = vmatpush2.bf16.msra.mxu0 0
    %178 = vmatprep.subr.bf16.mxu0 0
    %179 = vmatpush2.bf16.msra.mxu0 0
    %180 = vmatprep.subr.bf16.mxu0 0
    %181 = vmatpush2.bf16.msra.mxu0 0
    %182 = vmatprep.subr.bf16.mxu0 0
    %183 = vmatpush2.bf16.msra.mxu0 0
    %184 = vmatprep.subr.bf16.mxu0 0
    %185 = vmatpush2.bf16.msra.mxu0 0
    %186 = vmatprep.mubr.bf16.mxu0 0
    %187 = vmatmul.mubr.bf16.gmra.mxu0 %v75
    %v188 = vpop.f32.mrf.mxu0
    %v189 = vadd.f32 %v105, %v188
    %v190 = vpop.f32.mrf.mxu0
    %v191 = vpop.f32.mrf.mxu0
    %v192 = vpop.f32.mrf.mxu0
    %193 = vdwg.mxu0
    %v194 = vld [vmem:[%s4] sm:$0x1]
    %v196 = vlaneseq
    %v197 = vshrl.u32 %v196, 7
    %v198 = vsub.s32 0, %v197
    %v199 = vrot.slane %v194, %v198
    %v201 = vadd.f32 %v189, %v199
    %v202 = vmax.f32 %v201, 0.0
    %v203 = vpack.c.bf16 %v202, %v202
    %v204 = vld [vmem:[#allocation5] sm:$0xf]
    %v205 = vld [vmem:[#allocation5 + $0x4] sm:$0xf]
    %v206 = vld [vmem:[#allocation5 + $0x8] sm:$0xf]
    %v207 = vld [vmem:[#allocation5 + $0xc] sm:$0xf]
    %v208 = vld [vmem:[#allocation5 + $0x10] sm:$0xf]
    %v209 = vld [vmem:[#allocation5 + $0x14] sm:$0xf]
    %v210 = vld [vmem:[#allocation5 + $0x18] sm:$0xf]
    %v211 = vld [vmem:[#allocation5 + $0x1c] sm:$0xf]
    %v212 = vld [vmem:[#allocation5 + $0x20] sm:$0xf]
    %v213 = vld [vmem:[#allocation5 + $0x24] sm:$0xf]
    %v214 = vld [vmem:[#allocation5 + $0x28] sm:$0xf]
    %v215 = vld [vmem:[#allocation5 + $0x2c] sm:$0xf]
    %v216 = vld [vmem:[#allocation5 + $0x30] sm:$0xf]
    %v217 = vld [vmem:[#allocation5 + $0x34] sm:$0xf]
    %v218 = vld [vmem:[#allocation5 + $0x38] sm:$0xf]
    %v219 = vld [vmem:[#allocation5 + $0x3c] sm:$0xf]
    %v220 = vld [vmem:[%s6] sm:$0x1]
    %v222 = vlaneseq
    %v223 = vshrl.u32 %v222, 7
    %v224 = vsub.s32 0, %v223
    %v225 = vrot.slane %v220, %v224
    %v243 = vunpack.c.l.b16 %v204
    %v244 = vunpack.c.l.b16 %v205
    %v245 = vunpack.c.l.b16 %v206
    %v246 = vunpack.c.l.b16 %v207
    %v247 = vunpack.c.l.b16 %v208
    %v248 = vunpack.c.l.b16 %v209
    %v249 = vunpack.c.l.b16 %v210
    %v250 = vunpack.c.l.b16 %v211
    %v251 = vunpack.c.l.b16 %v212
    %v252 = vunpack.c.l.b16 %v213
    %v253 = vunpack.c.l.b16 %v214
    %v254 = vunpack.c.l.b16 %v215
    %v255 = vunpack.c.l.b16 %v216
    %v256 = vunpack.c.l.b16 %v217
    %v257 = vunpack.c.l.b16 %v218
    %v258 = vunpack.c.l.b16 %v219
    %v259 = vpack.c.b16 %v244, %v243
    %v260 = vpack.c.b16 %v246, %v245
    %v261 = vpack.c.b16 %v248, %v247
    %v262 = vpack.c.b16 %v250, %v249
    %v263 = vpack.c.b16 %v252, %v251
    %v264 = vpack.c.b16 %v254, %v253
    %v265 = vpack.c.b16 %v256, %v255
    %v266 = vpack.c.b16 %v258, %v257
    %275 = vmatprep.subr.bf16.mxu0 0
    %276 = vmatpush1.bf16.msra.mxu0 %v266
    %277 = vmatprep.subr.bf16.mxu0 0
    %278 = vmatpush1.bf16.msra.mxu0 %v265
    %279 = vmatprep.subr.bf16.mxu0 0
    %280 = vmatpush1.bf16.msra.mxu0 %v264
    %281 = vmatprep.subr.bf16.mxu0 0
    %282 = vmatpush1.bf16.msra.mxu0 %v263
    %283 = vmatprep.subr.bf16.mxu0 0
    %284 = vmatpush1.bf16.msra.mxu0 %v262
    %285 = vmatprep.subr.bf16.mxu0 0
    %286 = vmatpush1.bf16.msra.mxu0 %v261
    %287 = vmatprep.subr.bf16.mxu0 0
    %288 = vmatpush1.bf16.msra.mxu0 %v260
    %289 = vmatprep.subr.bf16.mxu0 0
    %290 = vmatpush1.bf16.msra.mxu0 %v259
    %291 = vmatprep.subr.bf16.mxu0 0
    %292 = vmatpush2.bf16.msra.mxu0 0
    %293 = vmatprep.subr.bf16.mxu0 0
    %294 = vmatpush2.bf16.msra.mxu0 0
    %295 = vmatprep.subr.bf16.mxu0 0
    %296 = vmatpush2.bf16.msra.mxu0 0
    %297 = vmatprep.subr.bf16.mxu0 0
    %298 = vmatpush2.bf16.msra.mxu0 0
    %299 = vmatprep.subr.bf16.mxu0 0
    %300 = vmatpush2.bf16.msra.mxu0 0
    %301 = vmatprep.subr.bf16.mxu0 0
    %302 = vmatpush2.bf16.msra.mxu0 0
    %303 = vmatprep.subr.bf16.mxu0 0
    %304 = vmatpush2.bf16.msra.mxu0 0
    %305 = vmatprep.subr.bf16.mxu0 0
    %306 = vmatpush2.bf16.msra.mxu0 0
    %307 = vmatprep.mubr.bf16.mxu0 0
    %308 = vmatmul.mubr.bf16.gmra.mxu0 %v203
    %v309 = vpop.f32.mrf.mxu0
    %v310 = vadd.f32 %v225, %v309
    %v311 = vpop.f32.mrf.mxu0
    %v312 = vpop.f32.mrf.mxu0
    %v313 = vpop.f32.mrf.mxu0
    %314 = vdwg.mxu0
    %v315 = vmax.f32 %v310, 0.0
    %v316 = vpack.c.bf16 %v315, %v315
    %v317 = vld [vmem:[#allocation7] sm:$0xf]
    %v318 = vld [vmem:[#allocation7 + $0x4] sm:$0xf]
    %v319 = vld [vmem:[#allocation7 + $0x8] sm:$0xf]
    %v320 = vld [vmem:[#allocation7 + $0xc] sm:$0xf]
    %v321 = vld [vmem:[#allocation7 + $0x10] sm:$0xf]
    %v322 = vld [vmem:[#allocation7 + $0x14] sm:$0xf]
    %v323 = vld [vmem:[#allocation7 + $0x18] sm:$0xf]
    %v324 = vld [vmem:[#allocation7 + $0x1c] sm:$0xf]
    %v325 = vld [vmem:[#allocation7 + $0x20] sm:$0xf]
    %v326 = vld [vmem:[#allocation7 + $0x24] sm:$0xf]
    %v327 = vld [vmem:[#allocation7 + $0x28] sm:$0xf]
    %v328 = vld [vmem:[#allocation7 + $0x2c] sm:$0xf]
    %v329 = vld [vmem:[#allocation7 + $0x30] sm:$0xf]
    %v330 = vld [vmem:[#allocation7 + $0x34] sm:$0xf]
    %v331 = vld [vmem:[#allocation7 + $0x38] sm:$0xf]
    %v332 = vld [vmem:[#allocation7 + $0x3c] sm:$0xf]
    %v333 = vld [vmem:[%s8] sm:$0x1]
    %v335 = vlaneseq
    %v336 = vshrl.u32 %v335, 7
    %v337 = vsub.s32 0, %v336
    %v338 = vrot.slane %v333, %v337
    %v356 = vunpack.c.l.b16 %v317
    %v357 = vunpack.c.l.b16 %v318
    %v358 = vunpack.c.l.b16 %v319
    %v359 = vunpack.c.l.b16 %v320
    %v360 = vunpack.c.l.b16 %v321
    %v361 = vunpack.c.l.b16 %v322
    %v362 = vunpack.c.l.b16 %v323
    %v363 = vunpack.c.l.b16 %v324
    %v364 = vunpack.c.l.b16 %v325
    %v365 = vunpack.c.l.b16 %v326
    %v366 = vunpack.c.l.b16 %v327
    %v367 = vunpack.c.l.b16 %v328
    %v368 = vunpack.c.l.b16 %v329
    %v369 = vunpack.c.l.b16 %v330
    %v370 = vunpack.c.l.b16 %v331
    %v371 = vunpack.c.l.b16 %v332
    %v372 = vpack.c.b16 %v357, %v356
    %v373 = vpack.c.b16 %v359, %v358
    %v374 = vpack.c.b16 %v361, %v360
    %v375 = vpack.c.b16 %v363, %v362
    %v376 = vpack.c.b16 %v365, %v364
    %v377 = vpack.c.b16 %v367, %v366
    %v378 = vpack.c.b16 %v369, %v368
    %v379 = vpack.c.b16 %v371, %v370
    %388 = vmatprep.subr.bf16.mxu0 0
    %389 = vmatpush1.bf16.msra.mxu0 %v379
    %390 = vmatprep.subr.bf16.mxu0 0
    %391 = vmatpush1.bf16.msra.mxu0 %v378
    %392 = vmatprep.subr.bf16.mxu0 0
    %393 = vmatpush1.bf16.msra.mxu0 %v377
    %394 = vmatprep.subr.bf16.mxu0 0
    %395 = vmatpush1.bf16.msra.mxu0 %v376
    %396 = vmatprep.subr.bf16.mxu0 0
    %397 = vmatpush1.bf16.msra.mxu0 %v375
    %398 = vmatprep.subr.bf16.mxu0 0
    %399 = vmatpush1.bf16.msra.mxu0 %v374
    %400 = vmatprep.subr.bf16.mxu0 0
    %401 = vmatpush1.bf16.msra.mxu0 %v373
    %402 = vmatprep.subr.bf16.mxu0 0
    %403 = vmatpush1.bf16.msra.mxu0 %v372
    %404 = vmatprep.subr.bf16.mxu0 0
    %405 = vmatpush2.bf16.msra.mxu0 0
    %406 = vmatprep.subr.bf16.mxu0 0
    %407 = vmatpush2.bf16.msra.mxu0 0
    %408 = vmatprep.subr.bf16.mxu0 0
    %409 = vmatpush2.bf16.msra.mxu0 0
    %410 = vmatprep.subr.bf16.mxu0 0
    %411 = vmatpush2.bf16.msra.mxu0 0
    %412 = vmatprep.subr.bf16.mxu0 0
    %413 = vmatpush2.bf16.msra.mxu0 0
    %414 = vmatprep.subr.bf16.mxu0 0
    %415 = vmatpush2.bf16.msra.mxu0 0
    %416 = vmatprep.subr.bf16.mxu0 0
    %417 = vmatpush2.bf16.msra.mxu0 0
    %418 = vmatprep.subr.bf16.mxu0 0
    %419 = vmatpush2.bf16.msra.mxu0 0
    %420 = vmatprep.mubr.bf16.mxu0 0
    %421 = vmatmul.mubr.bf16.gmra.mxu0 %v316
    %v422 = vpop.f32.mrf.mxu0
    %v423 = vadd.f32 %v338, %v422
    %v424 = vpop.f32.mrf.mxu0
    %v425 = vpop.f32.mrf.mxu0
    %v426 = vpop.f32.mrf.mxu0
    %427 = vdwg.mxu0
    %428 = vst [vmem:[#allocation8] sm:$0xff] %v423
    // Predicated region
    $region50: #{tpu_custom_call.1} parent=1 // pred_check
      _
    $region51: #{tpu_custom_call.1} parent=1 // pred_check_branch
      %430 = sbr.rel (0) target = $region53
    $region52: #{tpu_custom_call.1} parent=1 // pred_region
      %s432 = ssub.s32 128, 128
      %433 = vsyncadd [#allocation4], %s432
      %s435 = sshll.u32 [#allocation8], 4
      %s436 = int_to_ptr.vmem [resolvable:$true] %s435
      %438 = dma.vmem_to_hbm [thread:$0]  %s436, 128, %s9, [#allocation4]
    $region53: #{tpu_custom_call.1} parent=1 // pred_fallthru
      _
    // Predicated region
    $region54: #{tpu_custom_call.1} parent=1 // pred_check
      _
    $region55: #{tpu_custom_call.1} parent=1 // pred_check_branch
      %440 = sbr.rel (0) target = $region57
    $region56: #{tpu_custom_call.1} parent=1 // pred_region
      %441 = dma.done [#allocation4], 128
    $region57: #{tpu_custom_call.1} parent=1 // pred_fallthru
      _
    %442 = vsyncpa [#allocation3], 1
    %443 = vsyncpa [#allocation6], 1
    %444 = vsyncpa [#allocation4], 1

</llo_original>
